<compile_context>
chip_gen: v6e
topology: v6e:2x2x1
jax: 0.10.0
libtpu: 0.0.40
codegen_flags: <defaults>
</compile_context>

<pallas_src>
import math

import jax
import jax.numpy as jnp
from jax.experimental import pallas as pl
from jax.experimental.pallas import tpu as pltpu


# --------------------------------------------------------------------------------------
# Kernels
# --------------------------------------------------------------------------------------
def _pe_add_kernel_3d(tok_ref, pos_ref, out_ref):
    # tok_ref/out_ref: (TS, B, E); pos_ref: (TS, 1, E) -> cheap sublane broadcast over B.
    out_ref[...] = tok_ref[...] + pos_ref[...]


def _pe_add_kernel_2d(tok_ref, pos_ref, out_ref):
    # tok_ref/out_ref: (TS, B*E); pos_ref: (TS, E).
    # Static per-chunk adds: column b*E + e of the flatten holds pos[s, e];
    # no materialized (TS, B*E) replication temp, no concat.
    e = pos_ref.shape[-1]
    reps = tok_ref.shape[-1] // e
    p = pos_ref[...]
    for r in range(reps):
        sl = slice(r * e, (r + 1) * e)
        out_ref[:, sl] = tok_ref[:, sl] + p


# --------------------------------------------------------------------------------------
# Positional table (same as the PyTorch __init__, odd emb_size handled)
# --------------------------------------------------------------------------------------
def make_pos_embedding(emb_size: int, maxlen: int = 5000, dtype=jnp.float32):
    den = jnp.exp(
        -jnp.arange(0, emb_size, 2, dtype=jnp.float32) * math.log(10000.0) / emb_size
    )                                                           # (ceil(E/2),)
    pos = jnp.arange(0, maxlen, dtype=jnp.float32).reshape(maxlen, 1)
    ang = pos * den                                             # (maxlen, ceil(E/2))
    pe = jnp.zeros((maxlen, emb_size), dtype=jnp.float32)
    pe = pe.at[:, 0::2].set(jnp.sin(ang))
    pe = pe.at[:, 1::2].set(jnp.cos(ang[:, : emb_size // 2]))   # handles odd emb_size
    return pe[:, None, :].astype(dtype)                         # (maxlen, 1, emb_size)


# --------------------------------------------------------------------------------------
# Tiling heuristics
# --------------------------------------------------------------------------------------
def _sublane_tile(dtype) -> int:
    # 8 rows for 32-bit, 16 for 16-bit, 32 for 8-bit packed sublanes.
    return max(8, 32 // jnp.dtype(dtype).itemsize)


def _vmem_budget_bytes() -> int:
    """Pipelined-buffer budget, generation-aware but always under the default scoped
    VMEM limit (v5e: 16 MiB, v6e/v7x: 32 MiB) so no flag/limit bump is needed."""
    try:
        kind = jax.devices()[0].device_kind.lower()
    except Exception:
        kind = ""
    if ("v6" in kind) or ("v7" in kind):
        return 20 * 1024 * 1024
    return 12 * 1024 * 1024


def _choose_seq_tile(S, B, E, itemsize, sublane, budget_bytes, *, require_sublane,
                     min_steps=8, min_step_tok_bytes=2 * 1024 * 1024):
    """S-tile: as big as the VMEM budget allows, keep >= min_steps grid steps when that
    does not shrink a step below ~min_step_tok_bytes of token data (per-step overhead)."""
    tok_row = B * E * itemsize
    # Double-buffered tok-in + out + pos per sequence row (what auto-pipelining holds).
    pipeline_row = (2 * B * E + 2 * B * E + 2 * E) * itemsize
    ts_budget = max(1, budget_bytes // pipeline_row)
    ts_floor = max(1, -(-min_step_tok_bytes // tok_row))   # ceil
    ts_split = max(1, -(-S // min_steps))                  # ceil
    ts = min(ts_budget, max(ts_split, ts_floor))
    if ts >= S:
        return S
    if ts >= sublane:
        ts = (ts // sublane) * sublane                     # dtype-aware sublane align
    elif require_sublane:
        ts = min(sublane, S)                               # 2-D path needs mult-of-8 tiles
    return max(1, min(ts, S))


# --------------------------------------------------------------------------------------
# Forward
# --------------------------------------------------------------------------------------
def positional_encoding(token_embedding: jax.Array, pos_embedding: jax.Array) -> jax.Array:
    """forward: token_embedding + pos_embedding[:seq_len] (broadcast over batch)."""
    S, B, E = token_embedding.shape
    dtype = token_embedding.dtype
    itemsize = jnp.dtype(dtype).itemsize

    pos = pos_embedding[:S].astype(dtype)            # (S, 1, E), activation dtype
    sublane = _sublane_tile(dtype)
    budget = _vmem_budget_bytes()

    cost = pl.CostEstimate(
        flops=S * B * E,
        transcendentals=0,
        bytes_accessed=(2 * S * B * E + S * E) * itemsize,
    )
    # TODO(synk): on v7x, pltpu.CORE_PARALLEL on the S axis could split the stream
    # across both TensorCores; kept as plain "parallel" for cross-generation safety.
    params = pltpu.CompilerParams(dimension_semantics=("parallel",))

    if E % 128 == 0:
        # Main perf path: 3-D blocks, sublane broadcast of pos, lane-dense stores.
        TS = _choose_seq_tile(S, B, E, itemsize, sublane, budget, require_sublane=False)
        return pl.pallas_call(
            _pe_add_kernel_3d,
            out_shape=jax.ShapeDtypeStruct((S, B, E), dtype),
            grid=(pl.cdiv(S, TS),),
            in_specs=[
                pl.BlockSpec((TS, B, E), lambda i: (i, 0, 0)),
                pl.BlockSpec((TS, 1, E), lambda i: (i, 0, 0)),
            ],
            out_specs=pl.BlockSpec((TS, B, E), lambda i: (i, 0, 0)),
            compiler_params=params,
            cost_estimate=cost,
        )(token_embedding, pos)

    # Fallback (E not a multiple of 128, e.g. small demo sizes): flatten to (S, B*E) so
    # the lane axis is as dense as the problem allows; add pos with static chunk stores.
    tok2d = token_embedding.reshape(S, B * E)        # free contiguous reshape
    pos2d = pos[:, 0, :]                             # (S, E)
    TS = _choose_seq_tile(S, B, E, itemsize, sublane, budget, require_sublane=True)
    out2d = pl.pallas_call(
        _pe_add_kernel_2d,
        out_shape=jax.ShapeDtypeStruct((S, B * E), dtype),
        grid=(pl.cdiv(S, TS),),
        in_specs=[
            pl.BlockSpec((TS, B * E), lambda i: (i, 0)),
            pl.BlockSpec((TS, E), lambda i: (i, 0)),
        ],
        out_specs=pl.BlockSpec((TS, B * E), lambda i: (i, 0)),
        compiler_params=params,
        cost_estimate=cost,
    )(tok2d, pos2d)
    return out2d.reshape(S, B, E)


# --------------------------------------------------------------------------------------
# Demo / correctness check
# --------------------------------------------------------------------------------------
if __name__ == "__main__":
    key = jax.random.PRNGKey(0)

    # Case 1: small demo shapes (exercises the 2-D chunked path, E % 128 != 0).
    seq_len, batch, emb_size, maxlen = 8, 2, 32, 64
    k1, k2 = jax.random.split(key)
    tok = jax.random.normal(k1, (seq_len, batch, emb_size), dtype=jnp.float32)
    pe_buf = make_pos_embedding(emb_size, maxlen)
    out = jax.block_until_ready(positional_encoding(tok, pe_buf))
    ref = tok + pe_buf[:seq_len]
    assert out.shape == (seq_len, batch, emb_size)
    assert jnp.allclose(out, ref, atol=1e-6), "mismatch vs reference (2-D path)"

    # Case 2: lane-aligned emb_size (exercises the 3-D broadcast path, E % 128 == 0).
    emb_size2 = 128
    tok2 = jax.random.normal(k2, (seq_len, batch, emb_size2), dtype=jnp.float32)
    pe_buf2 = make_pos_embedding(emb_size2, maxlen)
    out2 = jax.block_until_ready(positional_encoding(tok2, pe_buf2))
    ref2 = tok2 + pe_buf2[:seq_len]
    assert out2.shape == (seq_len, batch, emb_size2)
    assert jnp.allclose(out2, ref2, atol=1e-6), "mismatch vs reference (3-D path)"

    print("KERNEL_OK")
</pallas_src>

<mosaic_0001>
module attributes {stable_mosaic.version = 11 : i64} {
  func.func @_pe_add_kernel_2d(%arg0: i32, %arg1: memref<8x64xf32, #tpu.memory_space<vmem>>, %arg2: memref<8x32xf32, #tpu.memory_space<vmem>>, %arg3: memref<8x64xf32, #tpu.memory_space<vmem>>) attributes {dimension_semantics = [#tpu.dimension_semantics<parallel>], iteration_bounds = array<i64: 1>, scalar_prefetch = 0 : i64, scratch_operands = 0 : i64, tpu.core_type = #tpu.core_type<tc>, window_params = [{transform_indices = @transform_0, window_bounds = array<i64: 8, 64>}, {transform_indices = @transform_1, window_bounds = array<i64: 8, 32>}, {transform_indices = @transform_2, window_bounds = array<i64: 8, 64>}]} {
    %c0 = arith.constant 0 : index
    %c0_0 = arith.constant 0 : index
    %0 = vector.load %arg2[%c0, %c0_0] : memref<8x32xf32, #tpu.memory_space<vmem>>, vector<8x32xf32>
    %c0_1 = arith.constant 0 : index
    %c0_2 = arith.constant 0 : index
    %1 = vector.load %arg1[%c0_1, %c0_2] : memref<8x64xf32, #tpu.memory_space<vmem>>, vector<8x32xf32>
    %2 = arith.addf %1, %0 : vector<8x32xf32>
    %c0_3 = arith.constant 0 : index
    %c0_4 = arith.constant 0 : index
    %3 = vector.load %arg3[%c0_3, %c0_4] : memref<8x64xf32, #tpu.memory_space<vmem>>, vector<8x32xf32>
    tpu.vector_store %arg3[%c0_3, %c0_4], %2 {strides = array<i32>} : memref<8x64xf32, #tpu.memory_space<vmem>>, vector<8x32xf32>,
    %c0_5 = arith.constant 0 : index
    %c32 = arith.constant 32 : index
    %4 = vector.load %arg1[%c0_5, %c32] : memref<8x64xf32, #tpu.memory_space<vmem>>, vector<8x32xf32>
    %5 = arith.addf %4, %0 : vector<8x32xf32>
    %c0_6 = arith.constant 0 : index
    %c32_7 = arith.constant 32 : index
    %6 = vector.load %arg3[%c0_6, %c32_7] : memref<8x64xf32, #tpu.memory_space<vmem>>, vector<8x32xf32>
    tpu.vector_store %arg3[%c0_6, %c32_7], %5 {strides = array<i32>} : memref<8x64xf32, #tpu.memory_space<vmem>>, vector<8x32xf32>,
    return
  }
  func.func @transform_0(%arg0: i32) -> (i32, i32) {
    %c0_i32 = arith.constant 0 : i32
    %c0_i32_0 = arith.constant 0 : i32
    return %arg0, %c0_i32 : i32, i32
  }
  func.func @transform_1(%arg0: i32) -> (i32, i32) {
    %c0_i32 = arith.constant 0 : i32
    %c0_i32_0 = arith.constant 0 : i32
    return %arg0, %c0_i32 : i32, i32
  }
  func.func @transform_2(%arg0: i32) -> (i32, i32) {
    %c0_i32 = arith.constant 0 : i32
    %c0_i32_0 = arith.constant 0 : i32
    return %arg0, %c0_i32 : i32, i32
  }
}

</mosaic_0001>

<llo_original>
// kernel: tpu_custom_call.1
$region0: #{tpu_custom_call.1}
  #allocation0 [shape = 'u32[]', space=smem, size = 0x4, offset = 0x4, fixed_abs, tag = 'smem constant byte address 0x4 - core index']
  #allocation1 [shape = 'u32[144,128]{1,0:T(1,128)}', space=vmem, size = 0x12000, scoped, tag = 'internal scratch']
  %s0 = inlined_call_operand.hbm [shape: f32[8,64], index: 0, kind: input, shape index: {}]
  %s1 = inlined_call_operand.hbm [shape: f32[8,32], index: 1, kind: input, shape index: {}]
  %s2 = inlined_call_operand.hbm [shape: f32[8,64], index: 2, kind: output, shape index: {}]
  %s3 = sld [smem:[#allocation0]]
  $region26: #{tpu_custom_call.1} parent=0
    _
  %s5 = ssub.s32 1, %s3
  %s6 = scalar_select 0, %s5, %s3
  $region1: #{tpu_custom_call.1} parent=0
    #allocation2 [shape = 'u8[4096]{0}', space=vmem, size = 0x1000, scoped, tag = 'input window, operand 0, single buffered']
    #allocation3 [shape = 's32[1]{0}', space=sflag, size = 0x4, scoped, tag = 'scoped memory for tpu_custom_call.1']
    #allocation4 [shape = 's32[1]{0}', space=sflag, size = 0x4, scoped, tag = 'scoped memory for tpu_custom_call.1']
    #allocation5 [shape = 'u8[4096]{0}', space=vmem, size = 0x1000, scoped, tag = 'input window, operand 1, single buffered']
    #allocation6 [shape = 's32[1]{0}', space=sflag, size = 0x4, scoped, tag = 'scoped memory for tpu_custom_call.1']
    #allocation7 [shape = 'u8[4096]{0}', space=vmem, size = 0x1000, scoped, tag = 'output window, operand 0, single buffered']
    %7 = vsyncpa [#allocation3], 0
    %8 = vsyncpa [#allocation6], 0
    %9 = vsyncpa [#allocation4], 0
    // Predicated region
    $region2: #{tpu_custom_call.1} parent=1 // pred_check
      _
    $region3: #{tpu_custom_call.1} parent=1 // pred_check_branch
      %11 = sbr.rel (0) target = $region5
    $region4: #{tpu_custom_call.1} parent=1 // pred_region
      %s13 = ssub.s32 128, 128
      %14 = vsyncadd [#allocation3], %s13
      %s16 = sshll.u32 [#allocation2], 4
      %s17 = int_to_ptr.vmem [resolvable:$true] %s16
      %19 = dma.hbm_to_vmem [thread:$0]  %s0, 128, %s17, [#allocation3]
    $region5: #{tpu_custom_call.1} parent=1 // pred_fallthru
      _
    // Predicated region
    $region6: #{tpu_custom_call.1} parent=1 // pred_check
      _
    $region7: #{tpu_custom_call.1} parent=1 // pred_check_branch
      %21 = sbr.rel (0) target = $region9
    $region8: #{tpu_custom_call.1} parent=1 // pred_region
      %s23 = ssub.s32 128, 128
      %24 = vsyncadd [#allocation6], %s23
      %s26 = sshll.u32 [#allocation5], 4
      %s27 = int_to_ptr.vmem [resolvable:$true] %s26
      %29 = dma.hbm_to_vmem [thread:$0]  %s1, 128, %s27, [#allocation6]
    $region9: #{tpu_custom_call.1} parent=1 // pred_fallthru
      _
    // Predicated region
    $region10: #{tpu_custom_call.1} parent=1 // pred_check
      _
    $region11: #{tpu_custom_call.1} parent=1 // pred_check_branch
      %31 = sbr.rel (0) target = $region13
    $region12: #{tpu_custom_call.1} parent=1 // pred_region
      %32 = dma.done [#allocation3], 128
    $region13: #{tpu_custom_call.1} parent=1 // pred_fallthru
      _
    // Predicated region
    $region14: #{tpu_custom_call.1} parent=1 // pred_check
      _
    $region15: #{tpu_custom_call.1} parent=1 // pred_check_branch
      %34 = sbr.rel (0) target = $region17
    $region16: #{tpu_custom_call.1} parent=1 // pred_region
      %35 = dma.done [#allocation6], 128
    $region17: #{tpu_custom_call.1} parent=1 // pred_fallthru
      _
    %v36 = vld [vmem:[#allocation5] sm:$0xff]
    %v37 = vld [vmem:[#allocation2] sm:$0xff]
    %v38 = vadd.f32 %v37, %v36
    %vm39 = vcmask 261120
    %40 = vst.msk [vmem:[#allocation7] sm:$0xff] %vm39, %v38
    %v41 = vld [vmem:[#allocation2] sm:$0xff]
    %43 = vrot.lane.b32.xlu0 %v36, 32
    %v44 = vpop.permute.xlu0 %43
    %v46 = vadd.f32 %v41, %v44
    %vm47 = vcmask 523520
    %48 = vst.msk [vmem:[#allocation7] sm:$0xff] %vm47, %v46
    // Predicated region
    $region18: #{tpu_custom_call.1} parent=1 // pred_check
      _
    $region19: #{tpu_custom_call.1} parent=1 // pred_check_branch
      %50 = sbr.rel (0) target = $region21
    $region20: #{tpu_custom_call.1} parent=1 // pred_region
      %s52 = ssub.s32 128, 128
      %53 = vsyncadd [#allocation4], %s52
      %s55 = sshll.u32 [#allocation7], 4
      %s56 = int_to_ptr.vmem [resolvable:$true] %s55
      %58 = dma.vmem_to_hbm [thread:$0]  %s56, 128, %s2, [#allocation4]
    $region21: #{tpu_custom_call.1} parent=1 // pred_fallthru
      _
    // Predicated region
    $region22: #{tpu_custom_call.1} parent=1 // pred_check
      _
    $region23: #{tpu_custom_call.1} parent=1 // pred_check_branch
      %60 = sbr.rel (0) target = $region25
    $region24: #{tpu_custom_call.1} parent=1 // pred_region
      %61 = dma.done [#allocation4], 128
    $region25: #{tpu_custom_call.1} parent=1 // pred_fallthru
      _
    %62 = vsyncpa [#allocation3], 1
    %63 = vsyncpa [#allocation6], 1
    %64 = vsyncpa [#allocation4], 1

</llo_original>
